<compile_context>
chip_gen: v5e
topology: v5e:2x2
jax: 0.10.0
libtpu: 0.0.40
codegen_flags: <defaults>
</compile_context>

<pallas_src>
import jax
import jax.numpy as jnp
import numpy as np
from jax.experimental import pallas as pl
from jax.experimental.pallas import tpu as pltpu

_SUBLANE = 8


def _round_up(n, m):
    return ((n + m - 1) // m) * m


def qvalue_kernel(x_ref, w1_ref, b1_ref, w2_ref, b2_ref, w3_ref, b3_ref, o_ref):
    # fc1 -> ReLU
    h1 = jnp.dot(x_ref[...], w1_ref[...], preferred_element_type=jnp.float32) + b1_ref[...]
    h1 = jnp.maximum(h1, 0.0)
    # fc2 -> ReLU
    h2 = jnp.dot(h1, w2_ref[...], preferred_element_type=jnp.float32) + b2_ref[...]
    h2 = jnp.maximum(h2, 0.0)
    # fc3 (no activation); narrow (action_dim-wide) store — masked vst is
    # negligible since the store slot is nowhere near saturated here.
    out = jnp.dot(h2, w3_ref[...], preferred_element_type=jnp.float32) + b3_ref[...]
    o_ref[...] = out.astype(o_ref.dtype)


def qvalue_net_forward(x, params, *, block_b=2048, vmem_limit_bytes=None):
    """x: [B, state_dim] float32; params: dict w1,b1,w2,b2,w3,b3 ([in,out] / [1,out])."""
    w1, b1 = params["w1"], params["b1"]
    w2, b2 = params["w2"], params["b2"]
    w3, b3 = params["w3"], params["b3"]

    B, state_dim = x.shape
    hidden_dim = w1.shape[1]
    action_dim = w3.shape[1]

    # Batch tile: multiple of 8 (sublane rule).  Cap so the grid has at least
    # two steps whenever the batch allows it, so v7x can split tiles across
    # both TensorCores; harmless on v5e/v6e.
    two_step_cap = _round_up(pl.cdiv(B, 2), _SUBLANE)
    tb = max(_SUBLANE, min(_round_up(block_b, _SUBLANE), two_step_cap))
    grid = (pl.cdiv(B, tb),)  # ragged last block handled by Pallas (no x pad)

    flops = 2 * B * (state_dim * hidden_dim + hidden_dim * hidden_dim + hidden_dim * action_dim)
    bytes_accessed = 4 * (
        B * state_dim                            # x
        + state_dim * hidden_dim + hidden_dim    # fc1
        + hidden_dim * hidden_dim + hidden_dim   # fc2
        + hidden_dim * action_dim + action_dim   # fc3
        + B * action_dim                         # output (narrow)
    )

    compiler_kwargs = dict(dimension_semantics=("parallel",))
    if vmem_limit_bytes is not None:
        compiler_kwargs["vmem_limit_bytes"] = vmem_limit_bytes

    out = pl.pallas_call(
        qvalue_kernel,
        out_shape=jax.ShapeDtypeStruct((B, action_dim), jnp.float32),
        grid=grid,
        in_specs=[
            pl.BlockSpec((tb, state_dim), lambda i: (i, 0)),           # x: streamed over batch
            pl.BlockSpec((state_dim, hidden_dim), lambda i: (0, 0)),   # w1: resident
            pl.BlockSpec((1, hidden_dim), lambda i: (0, 0)),           # b1: resident
            pl.BlockSpec((hidden_dim, hidden_dim), lambda i: (0, 0)),  # w2: resident
            pl.BlockSpec((1, hidden_dim), lambda i: (0, 0)),           # b2: resident
            pl.BlockSpec((hidden_dim, action_dim), lambda i: (0, 0)),  # w3: resident
            pl.BlockSpec((1, action_dim), lambda i: (0, 0)),           # b3: resident
        ],
        out_specs=pl.BlockSpec((tb, action_dim), lambda i: (i, 0)),
        compiler_params=pltpu.CompilerParams(**compiler_kwargs),
        cost_estimate=pl.CostEstimate(
            flops=flops, transcendentals=0, bytes_accessed=bytes_accessed
        ),
    )(x, w1, b1, w2, b2, w3, b3)

    return out


def init_params(key, state_dim, hidden_dim, action_dim):
    """Deterministic init mimicking torch.nn.Linear (uniform +-1/sqrt(fan_in)).

    Weights stored as [in, out] (transposed vs. PyTorch's [out, in])."""
    ks = jax.random.split(key, 6)

    def linear(kw, kb, fan_in, fan_out):
        bound = 1.0 / np.sqrt(fan_in)
        w = jax.random.uniform(kw, (fan_in, fan_out), jnp.float32, -bound, bound)
        b = jax.random.uniform(kb, (1, fan_out), jnp.float32, -bound, bound)
        return w, b

    w1, b1 = linear(ks[0], ks[1], state_dim, hidden_dim)
    w2, b2 = linear(ks[2], ks[3], hidden_dim, hidden_dim)
    w3, b3 = linear(ks[4], ks[5], hidden_dim, action_dim)
    return {"w1": w1, "b1": b1, "w2": w2, "b2": b2, "w3": w3, "b3": b3}


def reference_forward(x, p):
    h1 = jnp.maximum(x @ p["w1"] + p["b1"], 0.0)
    h2 = jnp.maximum(h1 @ p["w2"] + p["b2"], 0.0)
    return h2 @ p["w3"] + p["b3"]


if __name__ == "__main__":
    # Shapes consistent with the module: states dim 4, hidden=32, 2 actions.
    state_dim, hidden_dim, action_dim = 4, 32, 2

    key = jax.random.PRNGKey(0)
    k_x1, k_x2, k_p = jax.random.split(key, 3)
    params = init_params(k_p, state_dim, hidden_dim, action_dim)

    # 1) Tiny batch (single grid step, exact tile).
    x_small = jax.random.normal(k_x1, (8, state_dim), jnp.float32)
    out_small = jax.block_until_ready(qvalue_net_forward(x_small, params))
    ref_small = reference_forward(x_small, params)
    np.testing.assert_allclose(np.asarray(out_small), np.asarray(ref_small),
                               rtol=1e-5, atol=1e-5)
    assert out_small.shape == (8, action_dim)

    # 2) Batch not a multiple of the tile -> exercises multi-step grid and the
    #    ragged (out-of-bounds) last block with no explicit padding.
    x_big = jax.random.normal(k_x2, (300, state_dim), jnp.float32)
    out_big = jax.block_until_ready(qvalue_net_forward(x_big, params, block_b=128))
    ref_big = reference_forward(x_big, params)
    np.testing.assert_allclose(np.asarray(out_big), np.asarray(ref_big),
                               rtol=1e-5, atol=1e-5)
    assert out_big.shape == (300, action_dim)

    print("KERNEL_OK")
</pallas_src>

<mosaic_0001>
module attributes {stable_mosaic.version = 11 : i64} {
  func.func @qvalue_kernel(%arg0: i32, %arg1: memref<8x4xf32, #tpu.memory_space<vmem>>, %arg2: memref<4x32xf32, #tpu.memory_space<vmem>>, %arg3: memref<1x32xf32, #tpu.memory_space<vmem>>, %arg4: memref<32x32xf32, #tpu.memory_space<vmem>>, %arg5: memref<1x32xf32, #tpu.memory_space<vmem>>, %arg6: memref<32x2xf32, #tpu.memory_space<vmem>>, %arg7: memref<1x2xf32, #tpu.memory_space<vmem>>, %arg8: memref<8x2xf32, #tpu.memory_space<vmem>>) attributes {dimension_semantics = [#tpu.dimension_semantics<parallel>], iteration_bounds = array<i64: 1>, scalar_prefetch = 0 : i64, scratch_operands = 0 : i64, tpu.core_type = #tpu.core_type<tc>, window_params = [{transform_indices = @transform_0, window_bounds = array<i64: 8, 4>}, {pipeline_mode = #tpu.pipeline_mode<synchronous>, transform_indices = @transform_1, window_bounds = array<i64: 4, 32>}, {pipeline_mode = #tpu.pipeline_mode<synchronous>, transform_indices = @transform_2, window_bounds = array<i64: 1, 32>}, {pipeline_mode = #tpu.pipeline_mode<synchronous>, transform_indices = @transform_3, window_bounds = array<i64: 32, 32>}, {pipeline_mode = #tpu.pipeline_mode<synchronous>, transform_indices = @transform_4, window_bounds = array<i64: 1, 32>}, {pipeline_mode = #tpu.pipeline_mode<synchronous>, transform_indices = @transform_5, window_bounds = array<i64: 32, 2>}, {pipeline_mode = #tpu.pipeline_mode<synchronous>, transform_indices = @transform_6, window_bounds = array<i64: 1, 2>}, {transform_indices = @transform_7, window_bounds = array<i64: 8, 2>}]} {
    %c0 = arith.constant 0 : index
    %c0_0 = arith.constant 0 : index
    %0 = vector.load %arg1[%c0, %c0_0] : memref<8x4xf32, #tpu.memory_space<vmem>>, vector<8x4xf32>
    %c0_1 = arith.constant 0 : index
    %c0_2 = arith.constant 0 : index
    %1 = vector.load %arg2[%c0_1, %c0_2] : memref<4x32xf32, #tpu.memory_space<vmem>>, vector<4x32xf32>
    %cst = arith.constant dense<0.000000e+00> : vector<8x32xf32>
    %2 = tpu.matmul %0, %1, %cst {dimension_numbers = #tpu.dot_dimension_numbers<[1], [0], [0], [1], [0, 0, 1, 1], [], []>} : vector<8x4xf32>, vector<4x32xf32>, vector<8x32xf32> -> vector<8x32xf32>
    %c0_3 = arith.constant 0 : index
    %c0_4 = arith.constant 0 : index
    %3 = vector.load %arg3[%c0_3, %c0_4] : memref<1x32xf32, #tpu.memory_space<vmem>>, vector<1x32xf32>
    %4 = vector.broadcast %3 : vector<1x32xf32> to vector<8x32xf32>
    %5 = arith.addf %2, %4 : vector<8x32xf32>
    %cst_5 = arith.constant 0.000000e+00 : f32
    %6 = vector.broadcast %cst_5 : f32 to vector<8x32xf32>
    %7 = arith.maximumf %5, %6 : vector<8x32xf32>
    %c0_6 = arith.constant 0 : index
    %c0_7 = arith.constant 0 : index
    %8 = vector.load %arg4[%c0_6, %c0_7] : memref<32x32xf32, #tpu.memory_space<vmem>>, vector<32x32xf32>
    %cst_8 = arith.constant dense<0.000000e+00> : vector<8x32xf32>
    %9 = tpu.matmul %7, %8, %cst_8 {dimension_numbers = #tpu.dot_dimension_numbers<[1], [0], [0], [1], [0, 0, 1, 1], [], []>} : vector<8x32xf32>, vector<32x32xf32>, vector<8x32xf32> -> vector<8x32xf32>
    %c0_9 = arith.constant 0 : index
    %c0_10 = arith.constant 0 : index
    %10 = vector.load %arg5[%c0_9, %c0_10] : memref<1x32xf32, #tpu.memory_space<vmem>>, vector<1x32xf32>
    %11 = vector.broadcast %10 : vector<1x32xf32> to vector<8x32xf32>
    %12 = arith.addf %9, %11 : vector<8x32xf32>
    %cst_11 = arith.constant 0.000000e+00 : f32
    %13 = vector.broadcast %cst_11 : f32 to vector<8x32xf32>
    %14 = arith.maximumf %12, %13 : vector<8x32xf32>
    %c0_12 = arith.constant 0 : index
    %c0_13 = arith.constant 0 : index
    %15 = vector.load %arg6[%c0_12, %c0_13] : memref<32x2xf32, #tpu.memory_space<vmem>>, vector<32x2xf32>
    %cst_14 = arith.constant dense<0.000000e+00> : vector<8x2xf32>
    %16 = tpu.matmul %14, %15, %cst_14 {dimension_numbers = #tpu.dot_dimension_numbers<[1], [0], [0], [1], [0, 0, 1, 1], [], []>} : vector<8x32xf32>, vector<32x2xf32>, vector<8x2xf32> -> vector<8x2xf32>
    %c0_15 = arith.constant 0 : index
    %c0_16 = arith.constant 0 : index
    %17 = vector.load %arg7[%c0_15, %c0_16] : memref<1x2xf32, #tpu.memory_space<vmem>>, vector<1x2xf32>
    %18 = vector.broadcast %17 : vector<1x2xf32> to vector<8x2xf32>
    %19 = arith.addf %16, %18 : vector<8x2xf32>
    %c0_17 = arith.constant 0 : index
    %c0_18 = arith.constant 0 : index
    %20 = vector.load %arg8[%c0_17, %c0_18] : memref<8x2xf32, #tpu.memory_space<vmem>>, vector<8x2xf32>
    tpu.vector_store %arg8[%c0_17, %c0_18], %19 {strides = array<i32>} : memref<8x2xf32, #tpu.memory_space<vmem>>, vector<8x2xf32>,
    return
  }
  func.func @transform_0(%arg0: i32) -> (i32, i32) {
    %c0_i32 = arith.constant 0 : i32
    %c0_i32_0 = arith.constant 0 : i32
    return %arg0, %c0_i32 : i32, i32
  }
  func.func @transform_1(%arg0: i32) -> (i32, i32) {
    %c0_i32 = arith.constant 0 : i32
    %c0_i32_0 = arith.constant 0 : i32
    %c0_i32_1 = arith.constant 0 : i32
    return %c0_i32, %c0_i32_0 : i32, i32
  }
  func.func @transform_2(%arg0: i32) -> (i32, i32) {
    %c0_i32 = arith.constant 0 : i32
    %c0_i32_0 = arith.constant 0 : i32
    %c0_i32_1 = arith.constant 0 : i32
    return %c0_i32, %c0_i32_0 : i32, i32
  }
  func.func @transform_3(%arg0: i32) -> (i32, i32) {
    %c0_i32 = arith.constant 0 : i32
    %c0_i32_0 = arith.constant 0 : i32
    %c0_i32_1 = arith.constant 0 : i32
    return %c0_i32, %c0_i32_0 : i32, i32
  }
  func.func @transform_4(%arg0: i32) -> (i32, i32) {
    %c0_i32 = arith.constant 0 : i32
    %c0_i32_0 = arith.constant 0 : i32
    %c0_i32_1 = arith.constant 0 : i32
    return %c0_i32, %c0_i32_0 : i32, i32
  }
  func.func @transform_5(%arg0: i32) -> (i32, i32) {
    %c0_i32 = arith.constant 0 : i32
    %c0_i32_0 = arith.constant 0 : i32
    %c0_i32_1 = arith.constant 0 : i32
    return %c0_i32, %c0_i32_0 : i32, i32
  }
  func.func @transform_6(%arg0: i32) -> (i32, i32) {
    %c0_i32 = arith.constant 0 : i32
    %c0_i32_0 = arith.constant 0 : i32
    %c0_i32_1 = arith.constant 0 : i32
    return %c0_i32, %c0_i32_0 : i32, i32
  }
  func.func @transform_7(%arg0: i32) -> (i32, i32) {
    %c0_i32 = arith.constant 0 : i32
    %c0_i32_0 = arith.constant 0 : i32
    return %arg0, %c0_i32 : i32, i32
  }
}

</mosaic_0001>

<llo_original>
// kernel: tpu_custom_call.1
$region0: #{tpu_custom_call.1}
  #allocation0 [shape = 'u32[]', space=smem, size = 0x4, offset = 0x4, fixed_abs, tag = 'smem constant byte address 0x4 - core index']
  #allocation1 [shape = 'u32[72,128]{1,0:T(1,128)}', space=vmem, size = 0x9000, scoped, tag = 'internal scratch']
  %s0 = inlined_call_operand.vmem [shape: f32[8,4], index: 0, kind: input, shape index: {}]
  %s1 = inlined_call_operand.vmem [shape: f32[4,32], index: 1, kind: input, shape index: {}]
  %s2 = inlined_call_operand.vmem [shape: f32[1,32], index: 2, kind: input, shape index: {}]
  %s3 = inlined_call_operand.vmem [shape: f32[32,32], index: 3, kind: input, shape index: {}]
  %s4 = inlined_call_operand.vmem [shape: f32[1,32], index: 4, kind: input, shape index: {}]
  %s5 = inlined_call_operand.vmem [shape: f32[32,2], index: 5, kind: input, shape index: {}]
  %s6 = inlined_call_operand.vmem [shape: f32[1,2], index: 6, kind: input, shape index: {}]
  %s7 = inlined_call_operand.vmem [shape: f32[8,2], index: 7, kind: output, shape index: {}]
  %s8 = sld [smem:[#allocation0]]
  $region38: #{tpu_custom_call.1} parent=0
    _
  %s10 = ssub.s32 1, %s8
  %s11 = scalar_select 0, %s10, %s8
  // Predicated region
  $region2: #{tpu_custom_call.1} parent=0 // pred_check
    _
  $region3: #{tpu_custom_call.1} parent=0 // pred_check_branch
    %13 = sbr.rel (0) target = $region5
  $region4: #{tpu_custom_call.1} parent=0 // pred_region
    _
  $region5: #{tpu_custom_call.1} parent=0 // pred_fallthru
    _
  // Predicated region
  $region6: #{tpu_custom_call.1} parent=0 // pred_check
    _
  $region7: #{tpu_custom_call.1} parent=0 // pred_check_branch
    %15 = sbr.rel (0) target = $region9
  $region8: #{tpu_custom_call.1} parent=0 // pred_region
    _
  $region9: #{tpu_custom_call.1} parent=0 // pred_fallthru
    _
  // Predicated region
  $region10: #{tpu_custom_call.1} parent=0 // pred_check
    _
  $region11: #{tpu_custom_call.1} parent=0 // pred_check_branch
    %17 = sbr.rel (0) target = $region13
  $region12: #{tpu_custom_call.1} parent=0 // pred_region
    _
  $region13: #{tpu_custom_call.1} parent=0 // pred_fallthru
    _
  // Predicated region
  $region14: #{tpu_custom_call.1} parent=0 // pred_check
    _
  $region15: #{tpu_custom_call.1} parent=0 // pred_check_branch
    %19 = sbr.rel (0) target = $region17
  $region16: #{tpu_custom_call.1} parent=0 // pred_region
    _
  $region17: #{tpu_custom_call.1} parent=0 // pred_fallthru
    _
  // Predicated region
  $region18: #{tpu_custom_call.1} parent=0 // pred_check
    _
  $region19: #{tpu_custom_call.1} parent=0 // pred_check_branch
    %21 = sbr.rel (0) target = $region21
  $region20: #{tpu_custom_call.1} parent=0 // pred_region
    _
  $region21: #{tpu_custom_call.1} parent=0 // pred_fallthru
    _
  // Predicated region
  $region22: #{tpu_custom_call.1} parent=0 // pred_check
    _
  $region23: #{tpu_custom_call.1} parent=0 // pred_check_branch
    %23 = sbr.rel (0) target = $region25
  $region24: #{tpu_custom_call.1} parent=0 // pred_region
    _
  $region25: #{tpu_custom_call.1} parent=0 // pred_fallthru
    _
  // Predicated region
  $region26: #{tpu_custom_call.1} parent=0 // pred_check
    _
  $region27: #{tpu_custom_call.1} parent=0 // pred_check_branch
    %25 = sbr.rel (0) target = $region29
  $region28: #{tpu_custom_call.1} parent=0 // pred_region
    _
  $region29: #{tpu_custom_call.1} parent=0 // pred_fallthru
    _
  %v26 = vld [vmem:[%s0] sm:$0xff]
  %v27 = vld [vmem:[%s1] sm:$0xf]
  %v28 = vld [vmem:[%s2] sm:$0x1]
  %v30 = vperm.slane %v28, 0
  %vm32 = vcmask 31744
  %v34 = vsel %vm32, %v26, 0
  %vm36 = vcmask 1043456
  %v38 = vsel %vm36, %v27, 0
  %40 = vmatpush.msra.mxu0 0.0
  %41 = vmatpush.msra.mxu0 0.0
  %42 = vmatpush.msra.mxu0 0.0
  %43 = vmatpush.msra.mxu0 0.0
  %44 = vmatpush.msra.mxu0 0.0
  %45 = vmatpush.msra.mxu0 0.0
  %46 = vmatpush.msra.mxu0 0.0
  %47 = vmatpush.msra.mxu0 0.0
  %48 = vmatpush.msra.mxu0 0.0
  %49 = vmatpush.msra.mxu0 0.0
  %50 = vmatpush.msra.mxu0 0.0
  %51 = vmatpush.msra.mxu0 0.0
  %52 = vmatpush.msra.mxu0 0.0
  %53 = vmatpush.msra.mxu0 0.0
  %54 = vmatpush.msra.mxu0 0.0
  %55 = vmatpush.msra.mxu0 %v38
  %56 = vmatmul.f32.gmra.mxu0 %v34
  %v57 = vpop.f32.mrf.mxu0
  %v58 = vadd.f32 %v30, %v57
  %59 = vdwg.mxu0
  %v60 = vmax.f32 %v58, 0.0
  %v61 = vld [vmem:[%s3] sm:$0xff]
  %v62 = vld [vmem:[%s3 + $0x8] sm:$0xff]
  %v63 = vld [vmem:[%s3 + $0x10] sm:$0xff]
  %v64 = vld [vmem:[%s3 + $0x18] sm:$0xff]
  %v65 = vld [vmem:[%s4] sm:$0x1]
  %v67 = vperm.slane %v65, 0
  %vm69 = vcmask 261120
  %v71 = vsel %vm69, %v60, 0
  %73 = vmatpush.msra.mxu0 0.0
  %74 = vmatpush.msra.mxu0 0.0
  %75 = vmatpush.msra.mxu0 0.0
  %76 = vmatpush.msra.mxu0 0.0
  %77 = vmatpush.msra.mxu0 0.0
  %78 = vmatpush.msra.mxu0 0.0
  %79 = vmatpush.msra.mxu0 0.0
  %80 = vmatpush.msra.mxu0 0.0
  %81 = vmatpush.msra.mxu0 0.0
  %82 = vmatpush.msra.mxu0 0.0
  %83 = vmatpush.msra.mxu0 0.0
  %84 = vmatpush.msra.mxu0 0.0
  %85 = vmatpush.msra.mxu0 %v64
  %86 = vmatpush.msra.mxu0 %v63
  %87 = vmatpush.msra.mxu0 %v62
  %88 = vmatpush.msra.mxu0 %v61
  %89 = vmatmul.f32.gmra.mxu0 %v71
  %v90 = vpop.f32.mrf.mxu0
  %v91 = vadd.f32 %v67, %v90
  %92 = vdwg.mxu0
  %v93 = vmax.f32 %v91, 0.0
  %v94 = vld [vmem:[%s5] sm:$0xff]
  %v95 = vld [vmem:[%s5 + $0x8] sm:$0xff]
  %v96 = vld [vmem:[%s5 + $0x10] sm:$0xff]
  %v97 = vld [vmem:[%s5 + $0x18] sm:$0xff]
  %v98 = vld [vmem:[%s6] sm:$0x1]
  %v100 = vperm.slane %v98, 0
  %v103 = vsel %vm69, %v93, 0
  %105 = vmatpush.msra.mxu0 0.0
  %106 = vmatpush.msra.mxu0 0.0
  %107 = vmatpush.msra.mxu0 0.0
  %108 = vmatpush.msra.mxu0 0.0
  %109 = vmatpush.msra.mxu0 0.0
  %110 = vmatpush.msra.mxu0 0.0
  %111 = vmatpush.msra.mxu0 0.0
  %112 = vmatpush.msra.mxu0 0.0
  %113 = vmatpush.msra.mxu0 0.0
  %114 = vmatpush.msra.mxu0 0.0
  %115 = vmatpush.msra.mxu0 0.0
  %116 = vmatpush.msra.mxu0 0.0
  %117 = vmatpush.msra.mxu0 %v97
  %118 = vmatpush.msra.mxu0 %v96
  %119 = vmatpush.msra.mxu0 %v95
  %120 = vmatpush.msra.mxu0 %v94
  %121 = vmatmul.f32.gmra.mxu0 %v103
  %v122 = vpop.f32.mrf.mxu0
  %v123 = vadd.f32 %v100, %v122
  %124 = vdwg.mxu0
  %vm125 = vcmask 15360
  %126 = vst.msk [vmem:[%s7] sm:$0xff] %vm125, %v123
  // Predicated region
  $region30: #{tpu_custom_call.1} parent=0 // pred_check
    _
  $region31: #{tpu_custom_call.1} parent=0 // pred_check_branch
    %128 = sbr.rel (0) target = $region33
  $region32: #{tpu_custom_call.1} parent=0 // pred_region
    _
  $region33: #{tpu_custom_call.1} parent=0 // pred_fallthru
    _
  // Predicated region
  $region34: #{tpu_custom_call.1} parent=0 // pred_check
    _
  $region35: #{tpu_custom_call.1} parent=0 // pred_check_branch
    %130 = sbr.rel (0) target = $region37
  $region36: #{tpu_custom_call.1} parent=0 // pred_region
    _
  $region37: #{tpu_custom_call.1} parent=0 // pred_fallthru
    _

</llo_original>
